<compile_context>
chip_gen: v5e
topology: v5e:2x2
jax: 0.10.0
libtpu: 0.0.40
codegen_flags: <defaults>
</compile_context>

<pallas_src>
import functools

import numpy as np
import jax
import jax.numpy as jnp
from jax.experimental import pallas as pl
from jax.experimental.pallas import tpu as pltpu


_LANE = 128
_SUBLANE = 8
_LN_EPS = 1e-5


def _round_up(x, m):
    return ((x + m - 1) // m) * m


def _pad2d(a, rows, cols):
    return jnp.pad(a, ((0, rows - a.shape[0]), (0, cols - a.shape[1])))


def _const2(i):
    return (0, 0)


def _const3(i):
    return (0, 0, 0)


def _critic_kernel(obs_ref, act_ref,
                   tw_ref, tb_ref, ln_g_ref, ln_b_ref,
                   w0s_ref, w0a_ref, b0_ref,
                   w1_ref, b1_ref, w2_ref, b2_ref,
                   out_ref,
                   *, feat_dim, hidden_p, compute_dtype):
    f32 = jnp.float32

    # ---- trunk: Linear -> LayerNorm -> tanh --------------------------------
    x = jnp.dot(obs_ref[...].astype(compute_dtype), tw_ref[...],
                preferred_element_type=f32) + tb_ref[...]
    # Single-pass LN statistics (var = E[x^2] - mu^2).  Padded feature lanes
    # are exactly zero (zero-padded trunk weights / bias), so summing over the
    # padded lane dim and dividing by the REAL feature count is exact.
    inv_n = 1.0 / feat_dim
    mu = jnp.sum(x, axis=-1, keepdims=True) * inv_n
    ex2 = jnp.sum(x * x, axis=-1, keepdims=True) * inv_n
    var = ex2 - mu * mu
    xhat = (x - mu) * jax.lax.rsqrt(var + _LN_EPS)
    # ln_g / ln_b padded lanes are zero -> padded state lanes become tanh(0)=0.
    state = jnp.tanh(xhat * ln_g_ref[...] + ln_b_ref[...])

    # ---- layer 0 of BOTH q-heads, fused; no concat (split-K matmuls) -------
    h0 = (jnp.dot(state.astype(compute_dtype), w0s_ref[...],
                  preferred_element_type=f32)
          + jnp.dot(act_ref[...].astype(compute_dtype), w0a_ref[...],
                    preferred_element_type=f32)
          + b0_ref[...])
    h0 = jnp.maximum(h0, 0.0)                       # [TB, 2*Hp]

    # ---- layer 1 + output head, per head (lane-aligned static slices) ------
    qs = []
    for h in range(2):
        hh = h0[:, h * hidden_p:(h + 1) * hidden_p].astype(compute_dtype)
        h1 = jnp.dot(hh, w1_ref[h], preferred_element_type=f32) + b1_ref[h]
        h1 = jnp.maximum(h1, 0.0)
        # Final (hidden -> 1) as VPU multiply + lane reduction: avoids an N=1
        # matmul (keeps the MXU free) and a (B, 1) masked-store output.
        qs.append(jnp.sum(h1 * w2_ref[h], axis=-1, keepdims=True))

    out_ref[...] = jnp.concatenate(qs, axis=-1) + b2_ref[...]   # [TB, 2]


@functools.partial(jax.jit, static_argnames=("compute_dtype", "block_b"))
def critic_forward(obs, action, params, compute_dtype=jnp.float32, block_b=256):
    """Full Critic.forward as one Pallas kernel. Returns (q1, q2), shape [B]."""
    f32 = jnp.float32
    B, repr_dim = obs.shape
    action_dim = action.shape[1]
    feat_dim = params["ln_g"].shape[-1]
    hidden = params["q1_w1"].shape[0]

    # Lane-pad feature dims to 128; batch tile is a multiple of 8.
    R = _round_up(repr_dim, _LANE)
    A = _round_up(action_dim, _LANE)
    Fp = _round_up(feat_dim, _LANE)
    Hp = _round_up(hidden, _LANE)

    TB = min(block_b, _round_up(B, _SUBLANE))
    TB = _round_up(TB, _SUBLANE)
    Bp = _round_up(B, TB)

    cdt = compute_dtype

    obs_p = _pad2d(obs.astype(cdt), Bp, R)
    act_p = _pad2d(action.astype(cdt), Bp, A)

    tw = _pad2d(params["trunk_w"], R, Fp).astype(cdt)
    tb = _pad2d(params["trunk_b"], 1, Fp).astype(f32)
    ln_g = _pad2d(params["ln_g"], 1, Fp).astype(f32)
    ln_b = _pad2d(params["ln_b"], 1, Fp).astype(f32)

    def head(prefix):
        w0 = params[prefix + "_w0"]                       # [feat+act, hidden]
        w0s = _pad2d(w0[:feat_dim], Fp, Hp)               # state part
        w0a = _pad2d(w0[feat_dim:], A, Hp)                # action part
        b0 = _pad2d(params[prefix + "_b0"], 1, Hp)
        w1 = _pad2d(params[prefix + "_w1"], Hp, Hp)
        b1 = _pad2d(params[prefix + "_b1"], 1, Hp)
        w2 = _pad2d(params[prefix + "_w2"].reshape(1, hidden), 1, Hp)  # row
        b2 = params[prefix + "_b2"].reshape(1, 1)
        return w0s, w0a, b0, w1, b1, w2, b2

    h1p, h2p = head("q1"), head("q2")
    w0s = jnp.concatenate([h1p[0], h2p[0]], axis=1).astype(cdt)   # [Fp, 2*Hp]
    w0a = jnp.concatenate([h1p[1], h2p[1]], axis=1).astype(cdt)   # [A, 2*Hp]
    b0 = jnp.concatenate([h1p[2], h2p[2]], axis=1).astype(f32)    # [1, 2*Hp]
    w1 = jnp.stack([h1p[3], h2p[3]], axis=0).astype(cdt)          # [2, Hp, Hp]
    b1 = jnp.stack([h1p[4], h2p[4]], axis=0).astype(f32)          # [2, 1, Hp]
    w2 = jnp.stack([h1p[5], h2p[5]], axis=0).astype(f32)          # [2, 1, Hp]
    b2 = jnp.concatenate([h1p[6], h2p[6]], axis=1).astype(f32)    # [1, 2]

    args = (obs_p, act_p, tw, tb, ln_g, ln_b, w0s, w0a, b0, w1, b1, w2, b2)

    in_specs = [
        pl.BlockSpec((TB, R), lambda i: (i, 0)),     # obs: batch-tiled
        pl.BlockSpec((TB, A), lambda i: (i, 0)),     # action: batch-tiled
        pl.BlockSpec((R, Fp), _const2),              # weights: VMEM-resident
        pl.BlockSpec((1, Fp), _const2),
        pl.BlockSpec((1, Fp), _const2),
        pl.BlockSpec((1, Fp), _const2),
        pl.BlockSpec((Fp, 2 * Hp), _const2),
        pl.BlockSpec((A, 2 * Hp), _const2),
        pl.BlockSpec((1, 2 * Hp), _const2),
        pl.BlockSpec((2, Hp, Hp), _const3),
        pl.BlockSpec((2, 1, Hp), _const3),
        pl.BlockSpec((2, 1, Hp), _const3),
        pl.BlockSpec((1, 2), _const2),
    ]
    out_spec = pl.BlockSpec((TB, 2), lambda i: (i, 0))

    # VMEM budget: resident weights (x2 for buffering) + double-buffered batch
    # tiles + in-flight f32 activations, clamped to [32 MiB, 100 MiB] so it is
    # valid on v5e/v6e (128 MiB physical) and v7x (64 MiB physical).
    itemsize = np.dtype(cdt).itemsize
    weight_bytes = sum(int(a.size) * np.dtype(a.dtype).itemsize for a in args[2:])
    io_bytes = 2 * (TB * (R + A) * itemsize + TB * 2 * 4)
    act_bytes = 6 * TB * max(Fp, 2 * Hp) * 4
    vmem_limit = int(min(max(2 * weight_bytes + io_bytes + act_bytes, 32 * 2**20),
                         100 * 2**20))

    kernel = functools.partial(_critic_kernel, feat_dim=feat_dim,
                               hidden_p=Hp, compute_dtype=cdt)

    out = pl.pallas_call(
        kernel,
        grid=(Bp // TB,),
        in_specs=in_specs,
        out_specs=out_spec,
        out_shape=jax.ShapeDtypeStruct((Bp, 2), jnp.float32),
        compiler_params=pltpu.CompilerParams(
            dimension_semantics=("parallel",),   # shard batch over v7x's 2 TCs
            vmem_limit_bytes=vmem_limit),
    )(*args)

    q = out[:B]
    return q[:, 0], q[:, 1]


def init_params(key, repr_dim, feat_dim, action_dim, hidden_dim, output_dim=1):
    """Deterministic synthetic parameter init (weights stored as [in, out])."""
    ks = jax.random.split(key, 8)

    def lin(k, fan_in, fan_out):
        scale = 1.0 / jnp.sqrt(fan_in)
        w = jax.random.uniform(k, (fan_in, fan_out), jnp.float32, -scale, scale)
        b = jnp.zeros((1, fan_out), jnp.float32)
        return w, b

    sa_dim = feat_dim + action_dim
    p = {}
    p["trunk_w"], p["trunk_b"] = lin(ks[0], repr_dim, feat_dim)
    p["ln_g"] = jnp.ones((1, feat_dim), jnp.float32)
    p["ln_b"] = jnp.zeros((1, feat_dim), jnp.float32)
    p["q1_w0"], p["q1_b0"] = lin(ks[1], sa_dim, hidden_dim)
    p["q1_w1"], p["q1_b1"] = lin(ks[2], hidden_dim, hidden_dim)
    p["q1_w2"], p["q1_b2"] = lin(ks[3], hidden_dim, output_dim)
    p["q2_w0"], p["q2_b0"] = lin(ks[4], sa_dim, hidden_dim)
    p["q2_w1"], p["q2_b1"] = lin(ks[5], hidden_dim, hidden_dim)
    p["q2_w2"], p["q2_b2"] = lin(ks[6], hidden_dim, output_dim)
    return p


def critic_reference(obs, action, p):
    """Pure-JAX reference of the same forward, for a sanity check."""
    x = obs @ p["trunk_w"] + p["trunk_b"]
    mu = jnp.mean(x, -1, keepdims=True)
    var = jnp.mean((x - mu) ** 2, -1, keepdims=True)
    x = (x - mu) * jax.lax.rsqrt(var + _LN_EPS) * p["ln_g"] + p["ln_b"]
    state = jnp.tanh(x)
    sa = jnp.concatenate([state, action], axis=1)

    def q(sa, w0, b0, w1, b1, w2, b2):
        h = jnp.maximum(sa @ w0 + b0, 0.0)
        h = jnp.maximum(h @ w1 + b1, 0.0)
        return jnp.squeeze(h @ w2 + b2, -1)

    q1 = q(sa, p["q1_w0"], p["q1_b0"], p["q1_w1"], p["q1_b1"],
           p["q1_w2"], p["q1_b2"])
    q2 = q(sa, p["q2_w0"], p["q2_b0"], p["q2_w1"], p["q2_b1"],
           p["q2_w2"], p["q2_b2"])
    return q1, q2


if __name__ == "__main__":
    # Small shapes consistent with the module:
    #   obs: [B, repr_dim], action: [B, action_dim]
    B, REPR_DIM, FEAT_DIM, ACTION_DIM, HIDDEN_DIM = 8, 32, 32, 4, 32

    key = jax.random.PRNGKey(0)
    k_obs, k_act, k_param = jax.random.split(key, 3)
    obs = jax.random.normal(k_obs, (B, REPR_DIM), jnp.float32)
    action = jax.random.uniform(k_act, (B, ACTION_DIM), jnp.float32, -1.0, 1.0)
    params = init_params(k_param, REPR_DIM, FEAT_DIM, ACTION_DIM, HIDDEN_DIM)

    q1_ref, q2_ref = critic_reference(obs, action, params)

    # f32 compute path (tight check).
    q1, q2 = critic_forward(obs, action, params)
    jax.block_until_ready((q1, q2))
    assert q1.shape == (B,) and q2.shape == (B,)
    assert jnp.allclose(q1, q1_ref, atol=1e-3, rtol=1e-3), (q1, q1_ref)
    assert jnp.allclose(q2, q2_ref, atol=1e-3, rtol=1e-3), (q2, q2_ref)

    # bf16 matmul path (v6e/v7x fast path; f32 accumulation) — loose tolerance.
    q1b, q2b = critic_forward(obs, action, params, compute_dtype=jnp.bfloat16)
    jax.block_until_ready((q1b, q2b))
    assert jnp.allclose(q1b, q1_ref, atol=0.1, rtol=0.1), (q1b, q1_ref)
    assert jnp.allclose(q2b, q2_ref, atol=0.1, rtol=0.1), (q2b, q2_ref)

    print("KERNEL_OK")
</pallas_src>

<mosaic_0001>
module attributes {stable_mosaic.version = 11 : i64} {
  func.func @_critic_kernel(%arg0: i32, %arg1: memref<8x128xf32, #tpu.memory_space<vmem>>, %arg2: memref<8x128xf32, #tpu.memory_space<vmem>>, %arg3: memref<128x128xf32, #tpu.memory_space<vmem>>, %arg4: memref<1x128xf32, #tpu.memory_space<vmem>>, %arg5: memref<1x128xf32, #tpu.memory_space<vmem>>, %arg6: memref<1x128xf32, #tpu.memory_space<vmem>>, %arg7: memref<128x256xf32, #tpu.memory_space<vmem>>, %arg8: memref<128x256xf32, #tpu.memory_space<vmem>>, %arg9: memref<1x256xf32, #tpu.memory_space<vmem>>, %arg10: memref<2x128x128xf32, #tpu.memory_space<vmem>>, %arg11: memref<2x1x128xf32, #tpu.memory_space<vmem>>, %arg12: memref<2x1x128xf32, #tpu.memory_space<vmem>>, %arg13: memref<1x2xf32, #tpu.memory_space<vmem>>, %arg14: memref<8x2xf32, #tpu.memory_space<vmem>>) attributes {dimension_semantics = [#tpu.dimension_semantics<parallel>], iteration_bounds = array<i64: 1>, scalar_prefetch = 0 : i64, scratch_operands = 0 : i64, tpu.core_type = #tpu.core_type<tc>, window_params = [{transform_indices = @transform_0, window_bounds = array<i64: 8, 128>}, {transform_indices = @transform_1, window_bounds = array<i64: 8, 128>}, {pipeline_mode = #tpu.pipeline_mode<synchronous>, transform_indices = @transform_2, window_bounds = array<i64: 128, 128>}, {pipeline_mode = #tpu.pipeline_mode<synchronous>, transform_indices = @transform_3, window_bounds = array<i64: 1, 128>}, {pipeline_mode = #tpu.pipeline_mode<synchronous>, transform_indices = @transform_4, window_bounds = array<i64: 1, 128>}, {pipeline_mode = #tpu.pipeline_mode<synchronous>, transform_indices = @transform_5, window_bounds = array<i64: 1, 128>}, {pipeline_mode = #tpu.pipeline_mode<synchronous>, transform_indices = @transform_6, window_bounds = array<i64: 128, 256>}, {pipeline_mode = #tpu.pipeline_mode<synchronous>, transform_indices = @transform_7, window_bounds = array<i64: 128, 256>}, {pipeline_mode = #tpu.pipeline_mode<synchronous>, transform_indices = @transform_8, window_bounds = array<i64: 1, 256>}, {pipeline_mode = #tpu.pipeline_mode<synchronous>, transform_indices = @transform_9, window_bounds = array<i64: 2, 128, 128>}, {pipeline_mode = #tpu.pipeline_mode<synchronous>, transform_indices = @transform_10, window_bounds = array<i64: 2, 1, 128>}, {pipeline_mode = #tpu.pipeline_mode<synchronous>, transform_indices = @transform_11, window_bounds = array<i64: 2, 1, 128>}, {pipeline_mode = #tpu.pipeline_mode<synchronous>, transform_indices = @transform_12, window_bounds = array<i64: 1, 2>}, {transform_indices = @transform_13, window_bounds = array<i64: 8, 2>}]} {
    %c0 = arith.constant 0 : index
    %c0_0 = arith.constant 0 : index
    %0 = vector.load %arg1[%c0, %c0_0] : memref<8x128xf32, #tpu.memory_space<vmem>>, vector<8x128xf32>
    %c0_1 = arith.constant 0 : index
    %c0_2 = arith.constant 0 : index
    %1 = vector.load %arg3[%c0_1, %c0_2] : memref<128x128xf32, #tpu.memory_space<vmem>>, vector<128x128xf32>
    %cst = arith.constant dense<0.000000e+00> : vector<8x128xf32>
    %2 = tpu.matmul %0, %1, %cst {dimension_numbers = #tpu.dot_dimension_numbers<[1], [0], [0], [1], [0, 0, 1, 1], [], []>} : vector<8x128xf32>, vector<128x128xf32>, vector<8x128xf32> -> vector<8x128xf32>
    %c0_3 = arith.constant 0 : index
    %c0_4 = arith.constant 0 : index
    %3 = vector.load %arg4[%c0_3, %c0_4] : memref<1x128xf32, #tpu.memory_space<vmem>>, vector<1x128xf32>
    %4 = vector.broadcast %3 : vector<1x128xf32> to vector<8x128xf32>
    %5 = arith.addf %2, %4 : vector<8x128xf32>
    %cst_5 = arith.constant dense<0.000000e+00> : vector<8xf32>
    %6 = vector.multi_reduction <add>, %5, %cst_5 [1] : vector<8x128xf32> to vector<8xf32>
    %7 = vector.shape_cast %6 : vector<8xf32> to vector<8x1xf32>
    %cst_6 = arith.constant 3.125000e-02 : f32
    %8 = vector.broadcast %cst_6 : f32 to vector<8x1xf32>
    %9 = arith.mulf %7, %8 : vector<8x1xf32>
    %10 = arith.mulf %5, %5 : vector<8x128xf32>
    %cst_7 = arith.constant dense<0.000000e+00> : vector<8xf32>
    %11 = vector.multi_reduction <add>, %10, %cst_7 [1] : vector<8x128xf32> to vector<8xf32>
    %12 = vector.shape_cast %11 : vector<8xf32> to vector<8x1xf32>
    %cst_8 = arith.constant 3.125000e-02 : f32
    %13 = vector.broadcast %cst_8 : f32 to vector<8x1xf32>
    %14 = arith.mulf %12, %13 : vector<8x1xf32>
    %15 = arith.mulf %9, %9 : vector<8x1xf32>
    %16 = arith.subf %14, %15 : vector<8x1xf32>
    %17 = vector.broadcast %9 : vector<8x1xf32> to vector<8x128xf32>
    %18 = arith.subf %5, %17 : vector<8x128xf32>
    %cst_9 = arith.constant 9.99999974E-6 : f32
    %19 = vector.broadcast %cst_9 : f32 to vector<8x1xf32>
    %20 = arith.addf %16, %19 : vector<8x1xf32>
    %21 = math.rsqrt %20 : vector<8x1xf32>
    %22 = vector.broadcast %21 : vector<8x1xf32> to vector<8x128xf32>
    %23 = arith.mulf %18, %22 : vector<8x128xf32>
    %c0_10 = arith.constant 0 : index
    %c0_11 = arith.constant 0 : index
    %24 = vector.load %arg5[%c0_10, %c0_11] : memref<1x128xf32, #tpu.memory_space<vmem>>, vector<1x128xf32>
    %25 = vector.broadcast %24 : vector<1x128xf32> to vector<8x128xf32>
    %26 = arith.mulf %23, %25 : vector<8x128xf32>
    %c0_12 = arith.constant 0 : index
    %c0_13 = arith.constant 0 : index
    %27 = vector.load %arg6[%c0_12, %c0_13] : memref<1x128xf32, #tpu.memory_space<vmem>>, vector<1x128xf32>
    %28 = vector.broadcast %27 : vector<1x128xf32> to vector<8x128xf32>
    %29 = arith.addf %26, %28 : vector<8x128xf32>
    %30 = math.tanh %29 : vector<8x128xf32>
    %c0_14 = arith.constant 0 : index
    %c0_15 = arith.constant 0 : index
    %31 = vector.load %arg7[%c0_14, %c0_15] : memref<128x256xf32, #tpu.memory_space<vmem>>, vector<128x256xf32>
    %cst_16 = arith.constant dense<0.000000e+00> : vector<8x256xf32>
    %32 = tpu.matmul %30, %31, %cst_16 {dimension_numbers = #tpu.dot_dimension_numbers<[1], [0], [0], [1], [0, 0, 1, 1], [], []>} : vector<8x128xf32>, vector<128x256xf32>, vector<8x256xf32> -> vector<8x256xf32>
    %c0_17 = arith.constant 0 : index
    %c0_18 = arith.constant 0 : index
    %33 = vector.load %arg2[%c0_17, %c0_18] : memref<8x128xf32, #tpu.memory_space<vmem>>, vector<8x128xf32>
    %c0_19 = arith.constant 0 : index
    %c0_20 = arith.constant 0 : index
    %34 = vector.load %arg8[%c0_19, %c0_20] : memref<128x256xf32, #tpu.memory_space<vmem>>, vector<128x256xf32>
    %cst_21 = arith.constant dense<0.000000e+00> : vector<8x256xf32>
    %35 = tpu.matmul %33, %34, %cst_21 {dimension_numbers = #tpu.dot_dimension_numbers<[1], [0], [0], [1], [0, 0, 1, 1], [], []>} : vector<8x128xf32>, vector<128x256xf32>, vector<8x256xf32> -> vector<8x256xf32>
    %36 = arith.addf %32, %35 : vector<8x256xf32>
    %c0_22 = arith.constant 0 : index
    %c0_23 = arith.constant 0 : index
    %37 = vector.load %arg9[%c0_22, %c0_23] : memref<1x256xf32, #tpu.memory_space<vmem>>, vector<1x256xf32>
    %38 = vector.broadcast %37 : vector<1x256xf32> to vector<8x256xf32>
    %39 = arith.addf %36, %38 : vector<8x256xf32>
    %cst_24 = arith.constant 0.000000e+00 : f32
    %40 = vector.broadcast %cst_24 : f32 to vector<8x256xf32>
    %41 = arith.maximumf %39, %40 : vector<8x256xf32>
    %42 = vector.extract_strided_slice %41 {offsets = [0, 0], sizes = [8, 128], strides = [1, 1]} : vector<8x256xf32> to vector<8x128xf32>
    %c0_25 = arith.constant 0 : index
    %c0_26 = arith.constant 0 : index
    %c0_27 = arith.constant 0 : index
    %43 = vector.load %arg10[%c0_25, %c0_26, %c0_27] : memref<2x128x128xf32, #tpu.memory_space<vmem>>, vector<1x128x128xf32>
    %44 = vector.shape_cast %43 : vector<1x128x128xf32> to vector<128x128xf32>
    %cst_28 = arith.constant dense<0.000000e+00> : vector<8x128xf32>
    %45 = tpu.matmul %42, %44, %cst_28 {dimension_numbers = #tpu.dot_dimension_numbers<[1], [0], [0], [1], [0, 0, 1, 1], [], []>} : vector<8x128xf32>, vector<128x128xf32>, vector<8x128xf32> -> vector<8x128xf32>
    %c0_29 = arith.constant 0 : index
    %c0_30 = arith.constant 0 : index
    %c0_31 = arith.constant 0 : index
    %46 = vector.load %arg11[%c0_29, %c0_30, %c0_31] : memref<2x1x128xf32, #tpu.memory_space<vmem>>, vector<1x1x128xf32>
    %47 = vector.shape_cast %46 : vector<1x1x128xf32> to vector<1x128xf32>
    %48 = vector.broadcast %47 : vector<1x128xf32> to vector<8x128xf32>
    %49 = arith.addf %45, %48 : vector<8x128xf32>
    %cst_32 = arith.constant 0.000000e+00 : f32
    %50 = vector.broadcast %cst_32 : f32 to vector<8x128xf32>
    %51 = arith.maximumf %49, %50 : vector<8x128xf32>
    %c0_33 = arith.constant 0 : index
    %c0_34 = arith.constant 0 : index
    %c0_35 = arith.constant 0 : index
    %52 = vector.load %arg12[%c0_33, %c0_34, %c0_35] : memref<2x1x128xf32, #tpu.memory_space<vmem>>, vector<1x1x128xf32>
    %53 = vector.shape_cast %52 : vector<1x1x128xf32> to vector<1x128xf32>
    %54 = vector.broadcast %53 : vector<1x128xf32> to vector<8x128xf32>
    %55 = arith.mulf %51, %54 : vector<8x128xf32>
    %cst_36 = arith.constant dense<0.000000e+00> : vector<8xf32>
    %56 = vector.multi_reduction <add>, %55, %cst_36 [1] : vector<8x128xf32> to vector<8xf32>
    %57 = vector.shape_cast %56 : vector<8xf32> to vector<8x1xf32>
    %58 = vector.extract_strided_slice %41 {offsets = [0, 128], sizes = [8, 128], strides = [1, 1]} : vector<8x256xf32> to vector<8x128xf32>
    %c1 = arith.constant 1 : index
    %c0_37 = arith.constant 0 : index
    %c0_38 = arith.constant 0 : index
    %59 = vector.load %arg10[%c1, %c0_37, %c0_38] : memref<2x128x128xf32, #tpu.memory_space<vmem>>, vector<1x128x128xf32>
    %60 = vector.shape_cast %59 : vector<1x128x128xf32> to vector<128x128xf32>
    %cst_39 = arith.constant dense<0.000000e+00> : vector<8x128xf32>
    %61 = tpu.matmul %58, %60, %cst_39 {dimension_numbers = #tpu.dot_dimension_numbers<[1], [0], [0], [1], [0, 0, 1, 1], [], []>} : vector<8x128xf32>, vector<128x128xf32>, vector<8x128xf32> -> vector<8x128xf32>
    %c1_40 = arith.constant 1 : index
    %c0_41 = arith.constant 0 : index
    %c0_42 = arith.constant 0 : index
    %62 = vector.load %arg11[%c1_40, %c0_41, %c0_42] : memref<2x1x128xf32, #tpu.memory_space<vmem>>, vector<1x1x128xf32>
    %63 = vector.shape_cast %62 : vector<1x1x128xf32> to vector<1x128xf32>
    %64 = vector.broadcast %63 : vector<1x128xf32> to vector<8x128xf32>
    %65 = arith.addf %61, %64 : vector<8x128xf32>
    %cst_43 = arith.constant 0.000000e+00 : f32
    %66 = vector.broadcast %cst_43 : f32 to vector<8x128xf32>
    %67 = arith.maximumf %65, %66 : vector<8x128xf32>
    %c1_44 = arith.constant 1 : index
    %c0_45 = arith.constant 0 : index
    %c0_46 = arith.constant 0 : index
    %68 = vector.load %arg12[%c1_44, %c0_45, %c0_46] : memref<2x1x128xf32, #tpu.memory_space<vmem>>, vector<1x1x128xf32>
    %69 = vector.shape_cast %68 : vector<1x1x128xf32> to vector<1x128xf32>
    %70 = vector.broadcast %69 : vector<1x128xf32> to vector<8x128xf32>
    %71 = arith.mulf %67, %70 : vector<8x128xf32>
    %cst_47 = arith.constant dense<0.000000e+00> : vector<8xf32>
    %72 = vector.multi_reduction <add>, %71, %cst_47 [1] : vector<8x128xf32> to vector<8xf32>
    %73 = vector.shape_cast %72 : vector<8xf32> to vector<8x1xf32>
    %74 = tpu.concatenate %57, %73 in 1 : vector<8x1xf32>, vector<8x1xf32> -> vector<8x2xf32>
    %c0_48 = arith.constant 0 : index
    %c0_49 = arith.constant 0 : index
    %75 = vector.load %arg13[%c0_48, %c0_49] : memref<1x2xf32, #tpu.memory_space<vmem>>, vector<1x2xf32>
    %76 = vector.broadcast %75 : vector<1x2xf32> to vector<8x2xf32>
    %77 = arith.addf %74, %76 : vector<8x2xf32>
    %c0_50 = arith.constant 0 : index
    %c0_51 = arith.constant 0 : index
    %78 = vector.load %arg14[%c0_50, %c0_51] : memref<8x2xf32, #tpu.memory_space<vmem>>, vector<8x2xf32>
    tpu.vector_store %arg14[%c0_50, %c0_51], %77 {strides = array<i32>} : memref<8x2xf32, #tpu.memory_space<vmem>>, vector<8x2xf32>,
    return
  }
  func.func @transform_0(%arg0: i32) -> (i32, i32) {
    %c0_i32 = arith.constant 0 : i32
    %c0_i32_0 = arith.constant 0 : i32
    return %arg0, %c0_i32 : i32, i32
  }
  func.func @transform_1(%arg0: i32) -> (i32, i32) {
    %c0_i32 = arith.constant 0 : i32
    %c0_i32_0 = arith.constant 0 : i32
    return %arg0, %c0_i32 : i32, i32
  }
  func.func @transform_2(%arg0: i32) -> (i32, i32) {
    %c0_i32 = arith.constant 0 : i32
    %c0_i32_0 = arith.constant 0 : i32
    %c0_i32_1 = arith.constant 0 : i32
    return %c0_i32, %c0_i32_0 : i32, i32
  }
  func.func @transform_3(%arg0: i32) -> (i32, i32) {
    %c0_i32 = arith.constant 0 : i32
    %c0_i32_0 = arith.constant 0 : i32
    %c0_i32_1 = arith.constant 0 : i32
    return %c0_i32, %c0_i32_0 : i32, i32
  }
  func.func @transform_4(%arg0: i32) -> (i32, i32) {
    %c0_i32 = arith.constant 0 : i32
    %c0_i32_0 = arith.constant 0 : i32
    %c0_i32_1 = arith.constant 0 : i32
    return %c0_i32, %c0_i32_0 : i32, i32
  }
  func.func @transform_5(%arg0: i32) -> (i32, i32) {
    %c0_i32 = arith.constant 0 : i32
    %c0_i32_0 = arith.constant 0 : i32
    %c0_i32_1 = arith.constant 0 : i32
    return %c0_i32, %c0_i32_0 : i32, i32
  }
  func.func @transform_6(%arg0: i32) -> (i32, i32) {
    %c0_i32 = arith.constant 0 : i32
    %c0_i32_0 = arith.constant 0 : i32
    %c0_i32_1 = arith.constant 0 : i32
    return %c0_i32, %c0_i32_0 : i32, i32
  }
  func.func @transform_7(%arg0: i32) -> (i32, i32) {
    %c0_i32 = arith.constant 0 : i32
    %c0_i32_0 = arith.constant 0 : i32
    %c0_i32_1 = arith.constant 0 : i32
    return %c0_i32, %c0_i32_0 : i32, i32
  }
  func.func @transform_8(%arg0: i32) -> (i32, i32) {
    %c0_i32 = arith.constant 0 : i32
    %c0_i32_0 = arith.constant 0 : i32
    %c0_i32_1 = arith.constant 0 : i32
    return %c0_i32, %c0_i32_0 : i32, i32
  }
  func.func @transform_9(%arg0: i32) -> (i32, i32, i32) {
    %c0_i32 = arith.constant 0 : i32
    %c0_i32_0 = arith.constant 0 : i32
    %c0_i32_1 = arith.constant 0 : i32
    %c0_i32_2 = arith.constant 0 : i32
    return %c0_i32, %c0_i32_0, %c0_i32_1 : i32, i32, i32
  }
  func.func @transform_10(%arg0: i32) -> (i32, i32, i32) {
    %c0_i32 = arith.constant 0 : i32
    %c0_i32_0 = arith.constant 0 : i32
    %c0_i32_1 = arith.constant 0 : i32
    %c0_i32_2 = arith.constant 0 : i32
    return %c0_i32, %c0_i32_0, %c0_i32_1 : i32, i32, i32
  }
  func.func @transform_11(%arg0: i32) -> (i32, i32, i32) {
    %c0_i32 = arith.constant 0 : i32
    %c0_i32_0 = arith.constant 0 : i32
    %c0_i32_1 = arith.constant 0 : i32
    %c0_i32_2 = arith.constant 0 : i32
    return %c0_i32, %c0_i32_0, %c0_i32_1 : i32, i32, i32
  }
  func.func @transform_12(%arg0: i32) -> (i32, i32) {
    %c0_i32 = arith.constant 0 : i32
    %c0_i32_0 = arith.constant 0 : i32
    %c0_i32_1 = arith.constant 0 : i32
    return %c0_i32, %c0_i32_0 : i32, i32
  }
  func.func @transform_13(%arg0: i32) -> (i32, i32) {
    %c0_i32 = arith.constant 0 : i32
    %c0_i32_0 = arith.constant 0 : i32
    return %arg0, %c0_i32 : i32, i32
  }
}

</mosaic_0001>

<llo_original>
// kernel: critic_forward.1
$region0: #{critic_forward.1}
  #allocation0 [shape = 'u32[]', space=smem, size = 0x4, offset = 0x4, fixed_abs, tag = 'smem constant byte address 0x4 - core index']
  #allocation1 [shape = 'u32[72,128]{1,0:T(1,128)}', space=vmem, size = 0x9000, scoped, tag = 'internal scratch']
  %s0 = inlined_call_operand.vmem [shape: f32[8,128], index: 0, kind: input, shape index: {}]
  %s1 = inlined_call_operand.vmem [shape: f32[8,128], index: 1, kind: input, shape index: {}]
  %s2 = inlined_call_operand.vmem [shape: f32[128,128], index: 2, kind: input, shape index: {}]
  %s3 = inlined_call_operand.vmem [shape: f32[1,128], index: 3, kind: input, shape index: {}]
  %s4 = inlined_call_operand.vmem [shape: f32[1,128], index: 4, kind: input, shape index: {}]
  %s5 = inlined_call_operand.vmem [shape: f32[1,128], index: 5, kind: input, shape index: {}]
  %s6 = inlined_call_operand.vmem [shape: f32[128,256], index: 6, kind: input, shape index: {}]
  %s7 = inlined_call_operand.vmem [shape: f32[128,256], index: 7, kind: input, shape index: {}]
  %s8 = inlined_call_operand.vmem [shape: f32[1,256], index: 8, kind: input, shape index: {}]
  %s9 = inlined_call_operand.vmem [shape: f32[2,128,128], index: 9, kind: input, shape index: {}]
  %s10 = inlined_call_operand.vmem [shape: f32[2,1,128], index: 10, kind: input, shape index: {}]
  %s11 = inlined_call_operand.vmem [shape: f32[2,1,128], index: 11, kind: input, shape index: {}]
  %s12 = inlined_call_operand.vmem [shape: f32[1,2], index: 12, kind: input, shape index: {}]
  %s13 = inlined_call_operand.vmem [shape: f32[8,2], index: 13, kind: output, shape index: {}]
  %s14 = sld [smem:[#allocation0]]
  $region62: #{critic_forward.1} parent=0
    _
  %s16 = ssub.s32 1, %s14
  %s17 = scalar_select 0, %s16, %s14
  // Predicated region
  $region2: #{critic_forward.1} parent=0 // pred_check
    _
  $region3: #{critic_forward.1} parent=0 // pred_check_branch
    %19 = sbr.rel (0) target = $region5
  $region4: #{critic_forward.1} parent=0 // pred_region
    _
  $region5: #{critic_forward.1} parent=0 // pred_fallthru
    _
  // Predicated region
  $region6: #{critic_forward.1} parent=0 // pred_check
    _
  $region7: #{critic_forward.1} parent=0 // pred_check_branch
    %21 = sbr.rel (0) target = $region9
  $region8: #{critic_forward.1} parent=0 // pred_region
    _
  $region9: #{critic_forward.1} parent=0 // pred_fallthru
    _
  // Predicated region
  $region10: #{critic_forward.1} parent=0 // pred_check
    _
  $region11: #{critic_forward.1} parent=0 // pred_check_branch
    %23 = sbr.rel (0) target = $region13
  $region12: #{critic_forward.1} parent=0 // pred_region
    _
  $region13: #{critic_forward.1} parent=0 // pred_fallthru
    _
  // Predicated region
  $region14: #{critic_forward.1} parent=0 // pred_check
    _
  $region15: #{critic_forward.1} parent=0 // pred_check_branch
    %25 = sbr.rel (0) target = $region17
  $region16: #{critic_forward.1} parent=0 // pred_region
    _
  $region17: #{critic_forward.1} parent=0 // pred_fallthru
    _
  // Predicated region
  $region18: #{critic_forward.1} parent=0 // pred_check
    _
  $region19: #{critic_forward.1} parent=0 // pred_check_branch
    %27 = sbr.rel (0) target = $region21
  $region20: #{critic_forward.1} parent=0 // pred_region
    _
  $region21: #{critic_forward.1} parent=0 // pred_fallthru
    _
  // Predicated region
  $region22: #{critic_forward.1} parent=0 // pred_check
    _
  $region23: #{critic_forward.1} parent=0 // pred_check_branch
    %29 = sbr.rel (0) target = $region25
  $region24: #{critic_forward.1} parent=0 // pred_region
    _
  $region25: #{critic_forward.1} parent=0 // pred_fallthru
    _
  // Predicated region
  $region26: #{critic_forward.1} parent=0 // pred_check
    _
  $region27: #{critic_forward.1} parent=0 // pred_check_branch
    %31 = sbr.rel (0) target = $region29
  $region28: #{critic_forward.1} parent=0 // pred_region
    _
  $region29: #{critic_forward.1} parent=0 // pred_fallthru
    _
  // Predicated region
  $region30: #{critic_forward.1} parent=0 // pred_check
    _
  $region31: #{critic_forward.1} parent=0 // pred_check_branch
    %33 = sbr.rel (0) target = $region33
  $region32: #{critic_forward.1} parent=0 // pred_region
    _
  $region33: #{critic_forward.1} parent=0 // pred_fallthru
    _
  // Predicated region
  $region34: #{critic_forward.1} parent=0 // pred_check
    _
  $region35: #{critic_forward.1} parent=0 // pred_check_branch
    %35 = sbr.rel (0) target = $region37
  $region36: #{critic_forward.1} parent=0 // pred_region
    _
  $region37: #{critic_forward.1} parent=0 // pred_fallthru
    _
  // Predicated region
  $region38: #{critic_forward.1} parent=0 // pred_check
    _
  $region39: #{critic_forward.1} parent=0 // pred_check_branch
    %37 = sbr.rel (0) target = $region41
  $region40: #{critic_forward.1} parent=0 // pred_region
    _
  $region41: #{critic_forward.1} parent=0 // pred_fallthru
    _
  // Predicated region
  $region42: #{critic_forward.1} parent=0 // pred_check
    _
  $region43: #{critic_forward.1} parent=0 // pred_check_branch
    %39 = sbr.rel (0) target = $region45
  $region44: #{critic_forward.1} parent=0 // pred_region
    _
  $region45: #{critic_forward.1} parent=0 // pred_fallthru
    _
  // Predicated region
  $region46: #{critic_forward.1} parent=0 // pred_check
    _
  $region47: #{critic_forward.1} parent=0 // pred_check_branch
    %41 = sbr.rel (0) target = $region49
  $region48: #{critic_forward.1} parent=0 // pred_region
    _
  $region49: #{critic_forward.1} parent=0 // pred_fallthru
    _
  // Predicated region
  $region50: #{critic_forward.1} parent=0 // pred_check
    _
  $region51: #{critic_forward.1} parent=0 // pred_check_branch
    %43 = sbr.rel (0) target = $region53
  $region52: #{critic_forward.1} parent=0 // pred_region
    _
  $region53: #{critic_forward.1} parent=0 // pred_fallthru
    _
  %v44 = vld [vmem:[%s0] sm:$0xff]
  %v45 = vld [vmem:[%s2] sm:$0xff]
  %v46 = vld [vmem:[%s2 + $0x8] sm:$0xff]
  %v47 = vld [vmem:[%s2 + $0x10] sm:$0xff]
  %v48 = vld [vmem:[%s2 + $0x18] sm:$0xff]
  %v49 = vld [vmem:[%s2 + $0x20] sm:$0xff]
  %v50 = vld [vmem:[%s2 + $0x28] sm:$0xff]
  %v51 = vld [vmem:[%s2 + $0x30] sm:$0xff]
  %v52 = vld [vmem:[%s2 + $0x38] sm:$0xff]
  %v53 = vld [vmem:[%s2 + $0x40] sm:$0xff]
  %v54 = vld [vmem:[%s2 + $0x48] sm:$0xff]
  %v55 = vld [vmem:[%s2 + $0x50] sm:$0xff]
  %v56 = vld [vmem:[%s2 + $0x58] sm:$0xff]
  %v57 = vld [vmem:[%s2 + $0x60] sm:$0xff]
  %v58 = vld [vmem:[%s2 + $0x68] sm:$0xff]
  %v59 = vld [vmem:[%s2 + $0x70] sm:$0xff]
  %v60 = vld [vmem:[%s2 + $0x78] sm:$0xff]
  %v61 = vld [vmem:[%s3] sm:$0x1]
  %v63 = vperm.slane %v61, 0
  %65 = vmatpush.msra.mxu0 %v60
  %66 = vmatpush.msra.mxu0 %v59
  %67 = vmatpush.msra.mxu0 %v58
  %68 = vmatpush.msra.mxu0 %v57
  %69 = vmatpush.msra.mxu0 %v56
  %70 = vmatpush.msra.mxu0 %v55
  %71 = vmatpush.msra.mxu0 %v54
  %72 = vmatpush.msra.mxu0 %v53
  %73 = vmatpush.msra.mxu0 %v52
  %74 = vmatpush.msra.mxu0 %v51
  %75 = vmatpush.msra.mxu0 %v50
  %76 = vmatpush.msra.mxu0 %v49
  %77 = vmatpush.msra.mxu0 %v48
  %78 = vmatpush.msra.mxu0 %v47
  %79 = vmatpush.msra.mxu0 %v46
  %80 = vmatpush.msra.mxu0 %v45
  %81 = vmatmul.f32.gmra.mxu0 %v44
  %v82 = vpop.f32.mrf.mxu0
  %v83 = vadd.f32 %v63, %v82
  %84 = vdwg.mxu0
  %85 = vadd.xlane.f32.xlu0 %v83
  %v86 = vpop.xlane.xlu0 %85
  %v87 = vmul.f32 %v86, 0.03125
  %v88 = vmul.f32 %v83, %v83
  %89 = vadd.xlane.f32.xlu0 %v88
  %v90 = vpop.xlane.xlu0 %89
  %v91 = vmul.f32 %v90, 0.03125
  %v92 = vmul.f32 %v87, %v87
  %v93 = vsub.f32 %v91, %v92
  %v94 = vsub.f32 %v83, %v87
  %v95 = vadd.f32 %v93, 1e-05
  %v96 = vrsqrt.pop %v95
  %v97 = vmul.f32 %v96, %v95
  %v98 = vmul.f32 %v97, %v96
  %v99 = vmul.f32 0.5, %v98
  %v100 = vsub.f32 1.5, %v99
  %v101 = vmul.f32 %v96, %v100
  %vm102 = vweird.f32 %v95
  %vm103 = vweird.f32 %v96
  %vm104 = vmor %vm102, %vm103
  %v105 = vsel %vm104, %v96, %v101
  %v106 = vmul.f32 %v94, %v105
  %v107 = vld [vmem:[%s4] sm:$0x1]
  %v109 = vperm.slane %v107, 0
  %v111 = vmul.f32 %v106, %v109
  %v112 = vld [vmem:[%s5] sm:$0x1]
  %v114 = vperm.slane %v112, 0
  %v116 = vadd.f32 %v111, %v114
  %v117 = vtanh.pop %v116
  %v118 = vld [vmem:[%s6] sm:$0xff]
  %v119 = vld [vmem:[%s6 + $0x8] sm:$0xff]
  %v120 = vld [vmem:[%s6 + $0x10] sm:$0xff]
  %v121 = vld [vmem:[%s6 + $0x18] sm:$0xff]
  %v122 = vld [vmem:[%s6 + $0x20] sm:$0xff]
  %v123 = vld [vmem:[%s6 + $0x28] sm:$0xff]
  %v124 = vld [vmem:[%s6 + $0x30] sm:$0xff]
  %v125 = vld [vmem:[%s6 + $0x38] sm:$0xff]
  %v126 = vld [vmem:[%s6 + $0x40] sm:$0xff]
  %v127 = vld [vmem:[%s6 + $0x48] sm:$0xff]
  %v128 = vld [vmem:[%s6 + $0x50] sm:$0xff]
  %v129 = vld [vmem:[%s6 + $0x58] sm:$0xff]
  %v130 = vld [vmem:[%s6 + $0x60] sm:$0xff]
  %v131 = vld [vmem:[%s6 + $0x68] sm:$0xff]
  %v132 = vld [vmem:[%s6 + $0x70] sm:$0xff]
  %v133 = vld [vmem:[%s6 + $0x78] sm:$0xff]
  %v134 = vld [vmem:[%s6 + $0x80] sm:$0xff]
  %v135 = vld [vmem:[%s6 + $0x88] sm:$0xff]
  %v136 = vld [vmem:[%s6 + $0x90] sm:$0xff]
  %v137 = vld [vmem:[%s6 + $0x98] sm:$0xff]
  %v138 = vld [vmem:[%s6 + $0xa0] sm:$0xff]
  %v139 = vld [vmem:[%s6 + $0xa8] sm:$0xff]
  %v140 = vld [vmem:[%s6 + $0xb0] sm:$0xff]
  %v141 = vld [vmem:[%s6 + $0xb8] sm:$0xff]
  %v142 = vld [vmem:[%s6 + $0xc0] sm:$0xff]
  %v143 = vld [vmem:[%s6 + $0xc8] sm:$0xff]
  %v144 = vld [vmem:[%s6 + $0xd0] sm:$0xff]
  %v145 = vld [vmem:[%s6 + $0xd8] sm:$0xff]
  %v146 = vld [vmem:[%s6 + $0xe0] sm:$0xff]
  %v147 = vld [vmem:[%s6 + $0xe8] sm:$0xff]
  %v148 = vld [vmem:[%s6 + $0xf0] sm:$0xff]
  %v149 = vld [vmem:[%s6 + $0xf8] sm:$0xff]
  %v150 = vld [vmem:[%s1] sm:$0xff]
  %v151 = vld [vmem:[%s7] sm:$0xff]
  %v152 = vld [vmem:[%s7 + $0x8] sm:$0xff]
  %v153 = vld [vmem:[%s7 + $0x10] sm:$0xff]
  %v154 = vld [vmem:[%s7 + $0x18] sm:$0xff]
  %v155 = vld [vmem:[%s7 + $0x20] sm:$0xff]
  %v156 = vld [vmem:[%s7 + $0x28] sm:$0xff]
  %v157 = vld [vmem:[%s7 + $0x30] sm:$0xff]
  %v158 = vld [vmem:[%s7 + $0x38] sm:$0xff]
  %v159 = vld [vmem:[%s7 + $0x40] sm:$0xff]
  %v160 = vld [vmem:[%s7 + $0x48] sm:$0xff]
  %v161 = vld [vmem:[%s7 + $0x50] sm:$0xff]
  %v162 = vld [vmem:[%s7 + $0x58] sm:$0xff]
  %v163 = vld [vmem:[%s7 + $0x60] sm:$0xff]
  %v164 = vld [vmem:[%s7 + $0x68] sm:$0xff]
  %v165 = vld [vmem:[%s7 + $0x70] sm:$0xff]
  %v166 = vld [vmem:[%s7 + $0x78] sm:$0xff]
  %v167 = vld [vmem:[%s7 + $0x80] sm:$0xff]
  %v168 = vld [vmem:[%s7 + $0x88] sm:$0xff]
  %v169 = vld [vmem:[%s7 + $0x90] sm:$0xff]
  %v170 = vld [vmem:[%s7 + $0x98] sm:$0xff]
  %v171 = vld [vmem:[%s7 + $0xa0] sm:$0xff]
  %v172 = vld [vmem:[%s7 + $0xa8] sm:$0xff]
  %v173 = vld [vmem:[%s7 + $0xb0] sm:$0xff]
  %v174 = vld [vmem:[%s7 + $0xb8] sm:$0xff]
  %v175 = vld [vmem:[%s7 + $0xc0] sm:$0xff]
  %v176 = vld [vmem:[%s7 + $0xc8] sm:$0xff]
  %v177 = vld [vmem:[%s7 + $0xd0] sm:$0xff]
  %v178 = vld [vmem:[%s7 + $0xd8] sm:$0xff]
  %v179 = vld [vmem:[%s7 + $0xe0] sm:$0xff]
  %v180 = vld [vmem:[%s7 + $0xe8] sm:$0xff]
  %v181 = vld [vmem:[%s7 + $0xf0] sm:$0xff]
  %v182 = vld [vmem:[%s7 + $0xf8] sm:$0xff]
  %183 = vmatpush.msra.mxu0 %v181
  %184 = vmatpush.msra.mxu0 %v179
  %185 = vmatpush.msra.mxu0 %v177
  %186 = vmatpush.msra.mxu0 %v175
  %187 = vmatpush.msra.mxu0 %v173
  %188 = vmatpush.msra.mxu0 %v171
  %189 = vmatpush.msra.mxu0 %v169
  %190 = vmatpush.msra.mxu0 %v167
  %191 = vmatpush.msra.mxu0 %v165
  %192 = vmatpush.msra.mxu0 %v163
  %193 = vmatpush.msra.mxu0 %v161
  %194 = vmatpush.msra.mxu0 %v159
  %195 = vmatpush.msra.mxu0 %v157
  %196 = vmatpush.msra.mxu0 %v155
  %197 = vmatpush.msra.mxu0 %v153
  %198 = vmatpush.msra.mxu0 %v151
  %199 = vmatmul.f32.gmra.mxu0 %v150
  %v200 = vpop.f32.mrf.mxu0
  %v201 = vadd.f32 0.0, %v200
  %202 = vdwg.mxu0
  %203 = vmatpush.msra.mxu0 %v182
  %204 = vmatpush.msra.mxu0 %v180
  %205 = vmatpush.msra.mxu0 %v178
  %206 = vmatpush.msra.mxu0 %v176
  %207 = vmatpush.msra.mxu0 %v174
  %208 = vmatpush.msra.mxu0 %v172
  %209 = vmatpush.msra.mxu0 %v170
  %210 = vmatpush.msra.mxu0 %v168
  %211 = vmatpush.msra.mxu0 %v166
  %212 = vmatpush.msra.mxu0 %v164
  %213 = vmatpush.msra.mxu0 %v162
  %214 = vmatpush.msra.mxu0 %v160
  %215 = vmatpush.msra.mxu0 %v158
  %216 = vmatpush.msra.mxu0 %v156
  %217 = vmatpush.msra.mxu0 %v154
  %218 = vmatpush.msra.mxu0 %v152
  %219 = vmatmul.f32.gmra.mxu0 %v150
  %v220 = vpop.f32.mrf.mxu0
  %v221 = vadd.f32 0.0, %v220
  %222 = vdwg.mxu0
  %223 = vmatpush.msra.mxu0 %v148
  %224 = vmatpush.msra.mxu0 %v146
  %225 = vmatpush.msra.mxu0 %v144
  %226 = vmatpush.msra.mxu0 %v142
  %227 = vmatpush.msra.mxu0 %v140
  %228 = vmatpush.msra.mxu0 %v138
  %229 = vmatpush.msra.mxu0 %v136
  %230 = vmatpush.msra.mxu0 %v134
  %231 = vmatpush.msra.mxu0 %v132
  %232 = vmatpush.msra.mxu0 %v130
  %233 = vmatpush.msra.mxu0 %v128
  %234 = vmatpush.msra.mxu0 %v126
  %235 = vmatpush.msra.mxu0 %v124
  %236 = vmatpush.msra.mxu0 %v122
  %237 = vmatpush.msra.mxu0 %v120
  %238 = vmatpush.msra.mxu0 %v118
  %239 = vmatmul.f32.gmra.mxu0 %v117
  %v240 = vpop.f32.mrf.mxu0
  %v241 = vadd.f32 %v201, %v240
  %242 = vdwg.mxu0
  %243 = vmatpush.msra.mxu0 %v149
  %244 = vmatpush.msra.mxu0 %v147
  %245 = vmatpush.msra.mxu0 %v145
  %246 = vmatpush.msra.mxu0 %v143
  %247 = vmatpush.msra.mxu0 %v141
  %248 = vmatpush.msra.mxu0 %v139
  %249 = vmatpush.msra.mxu0 %v137
  %250 = vmatpush.msra.mxu0 %v135
  %251 = vmatpush.msra.mxu0 %v133
  %252 = vmatpush.msra.mxu0 %v131
  %253 = vmatpush.msra.mxu0 %v129
  %254 = vmatpush.msra.mxu0 %v127
  %255 = vmatpush.msra.mxu0 %v125
  %256 = vmatpush.msra.mxu0 %v123
  %257 = vmatpush.msra.mxu0 %v121
  %258 = vmatpush.msra.mxu0 %v119
  %259 = vmatmul.f32.gmra.mxu0 %v117
  %v260 = vpop.f32.mrf.mxu0
  %v261 = vadd.f32 %v221, %v260
  %262 = vdwg.mxu0
  %v263 = vld [vmem:[%s8] sm:$0x3]
  %v265 = vperm.slane %v263, 0
  %v266 = vperm.slane %v263, 1
  %v269 = vadd.f32 %v241, %v265
  %v270 = vadd.f32 %v261, %v266
  %v271 = vmax.f32 %v269, 0.0
  %v272 = vmax.f32 %v270, 0.0
  %v273 = vld [vmem:[%s9] sm:$0xff]
  %v274 = vld [vmem:[%s9 + $0x8] sm:$0xff]
  %v275 = vld [vmem:[%s9 + $0x10] sm:$0xff]
  %v276 = vld [vmem:[%s9 + $0x18] sm:$0xff]
  %v277 = vld [vmem:[%s9 + $0x20] sm:$0xff]
  %v278 = vld [vmem:[%s9 + $0x28] sm:$0xff]
  %v279 = vld [vmem:[%s9 + $0x30] sm:$0xff]
  %v280 = vld [vmem:[%s9 + $0x38] sm:$0xff]
  %v281 = vld [vmem:[%s9 + $0x40] sm:$0xff]
  %v282 = vld [vmem:[%s9 + $0x48] sm:$0xff]
  %v283 = vld [vmem:[%s9 + $0x50] sm:$0xff]
  %v284 = vld [vmem:[%s9 + $0x58] sm:$0xff]
  %v285 = vld [vmem:[%s9 + $0x60] sm:$0xff]
  %v286 = vld [vmem:[%s9 + $0x68] sm:$0xff]
  %v287 = vld [vmem:[%s9 + $0x70] sm:$0xff]
  %v288 = vld [vmem:[%s9 + $0x78] sm:$0xff]
  %v289 = vld [vmem:[%s10] sm:$0x1]
  %v291 = vperm.slane %v289, 0
  %293 = vmatpush.msra.mxu0 %v288
  %294 = vmatpush.msra.mxu0 %v287
  %295 = vmatpush.msra.mxu0 %v286
  %296 = vmatpush.msra.mxu0 %v285
  %297 = vmatpush.msra.mxu0 %v284
  %298 = vmatpush.msra.mxu0 %v283
  %299 = vmatpush.msra.mxu0 %v282
  %300 = vmatpush.msra.mxu0 %v281
  %301 = vmatpush.msra.mxu0 %v280
  %302 = vmatpush.msra.mxu0 %v279
  %303 = vmatpush.msra.mxu0 %v278
  %304 = vmatpush.msra.mxu0 %v277
  %305 = vmatpush.msra.mxu0 %v276
  %306 = vmatpush.msra.mxu0 %v275
  %307 = vmatpush.msra.mxu0 %v274
  %308 = vmatpush.msra.mxu0 %v273
  %309 = vmatmul.f32.gmra.mxu0 %v271
  %v310 = vpop.f32.mrf.mxu0
  %v311 = vadd.f32 %v291, %v310
  %312 = vdwg.mxu0
  %v313 = vmax.f32 %v311, 0.0
  %v314 = vld [vmem:[%s11] sm:$0x1]
  %v316 = vperm.slane %v314, 0
  %v318 = vmul.f32 %v313, %v316
  %319 = vadd.xlane.f32.xlu0 %v318
  %v320 = vpop.xlane.xlu0 %319
  %s321 = scalar_lea.vmem %s9, 128
  %v322 = vld [vmem:[%s321] sm:$0xff]
  %v323 = vld [vmem:[%s321 + $0x8] sm:$0xff]
  %v324 = vld [vmem:[%s321 + $0x10] sm:$0xff]
  %v325 = vld [vmem:[%s321 + $0x18] sm:$0xff]
  %v326 = vld [vmem:[%s321 + $0x20] sm:$0xff]
  %v327 = vld [vmem:[%s321 + $0x28] sm:$0xff]
  %v328 = vld [vmem:[%s321 + $0x30] sm:$0xff]
  %v329 = vld [vmem:[%s321 + $0x38] sm:$0xff]
  %v330 = vld [vmem:[%s321 + $0x40] sm:$0xff]
  %v331 = vld [vmem:[%s321 + $0x48] sm:$0xff]
  %v332 = vld [vmem:[%s321 + $0x50] sm:$0xff]
  %v333 = vld [vmem:[%s321 + $0x58] sm:$0xff]
  %v334 = vld [vmem:[%s321 + $0x60] sm:$0xff]
  %v335 = vld [vmem:[%s321 + $0x68] sm:$0xff]
  %v336 = vld [vmem:[%s321 + $0x70] sm:$0xff]
  %v337 = vld [vmem:[%s321 + $0x78] sm:$0xff]
  %s338 = scalar_lea.vmem %s10, 1
  %v339 = vld [vmem:[%s338] sm:$0x1]
  %v341 = vperm.slane %v339, 0
  %343 = vmatpush.msra.mxu0 %v337
  %344 = vmatpush.msra.mxu0 %v336
  %345 = vmatpush.msra.mxu0 %v335
  %346 = vmatpush.msra.mxu0 %v334
  %347 = vmatpush.msra.mxu0 %v333
  %348 = vmatpush.msra.mxu0 %v332
  %349 = vmatpush.msra.mxu0 %v331
  %350 = vmatpush.msra.mxu0 %v330
  %351 = vmatpush.msra.mxu0 %v329
  %352 = vmatpush.msra.mxu0 %v328
  %353 = vmatpush.msra.mxu0 %v327
  %354 = vmatpush.msra.mxu0 %v326
  %355 = vmatpush.msra.mxu0 %v325
  %356 = vmatpush.msra.mxu0 %v324
  %357 = vmatpush.msra.mxu0 %v323
  %358 = vmatpush.msra.mxu0 %v322
  %359 = vmatmul.f32.gmra.mxu0 %v272
  %v360 = vpop.f32.mrf.mxu0
  %v361 = vadd.f32 %v341, %v360
  %362 = vdwg.mxu0
  %v363 = vmax.f32 %v361, 0.0
  %s364 = scalar_lea.vmem %s11, 1
  %v365 = vld [vmem:[%s364] sm:$0x1]
  %v367 = vperm.slane %v365, 0
  %v369 = vmul.f32 %v363, %v367
  %370 = vadd.xlane.f32.xlu0 %v369
  %v371 = vpop.xlane.xlu0 %370
  %vm372 = vcmask 7168
  %v373 = vsel %vm372, %v320, %v371
  %v374 = vld [vmem:[%s12] sm:$0x1]
  %v376 = vperm.slane %v374, 0
  %v378 = vadd.f32 %v373, %v376
  %vm379 = vcmask 15360
  %380 = vst.msk [vmem:[%s13] sm:$0xff] %vm379, %v378
  // Predicated region
  $region54: #{critic_forward.1} parent=0 // pred_check
    _
  $region55: #{critic_forward.1} parent=0 // pred_check_branch
    %382 = sbr.rel (0) target = $region57
  $region56: #{critic_forward.1} parent=0 // pred_region
    _
  $region57: #{critic_forward.1} parent=0 // pred_fallthru
    _
  // Predicated region
  $region58: #{critic_forward.1} parent=0 // pred_check
    _
  $region59: #{critic_forward.1} parent=0 // pred_check_branch
    %384 = sbr.rel (0) target = $region61
  $region60: #{critic_forward.1} parent=0 // pred_region
    _
  $region61: #{critic_forward.1} parent=0 // pred_fallthru
    _

</llo_original>
